<compile_context>
chip_gen: v5e
topology: v5e:2x2
jax: 0.10.0
libtpu: 0.0.40
codegen_flags: <defaults>
</compile_context>

<pallas_src>
import functools

import jax
import jax.numpy as jnp
from jax.experimental import pallas as pl
from jax.experimental.pallas import tpu as pltpu


def _round_up(x, m):
    return (x + m - 1) // m * m


# ----------------------------- Pallas kernels --------------------------------

def _conv_stats_kernel(p_ref, w_ref, y_ref, stats_ref):
    """One (tp, Kp) x (Kp, Cp) MXU matmul tile and per-tile channel stats.

    p_ref:     (tp, Kp)  bf16 im2col patch tile
    w_ref:     (Kp, Cp)  bf16 reshaped conv weight (same block every step)
    y_ref:     (tp, Cp)  bf16 conv output tile (cast after f32 stats)
    stats_ref: (2, Cp)   f32 per-tile [sum; sum-of-squares] partials
    """
    y = jnp.dot(p_ref[...], w_ref[...], preferred_element_type=jnp.float32)
    # Per-tile partials, reduced outside the kernel so both grid axes stay
    # "parallel".  f32 E[y^2]-E[y]^2 is fine at BN activation scales.
    # TODO(synk): switch to centered per-tile partials if |mean| >> std.
    stats_ref[0:1, :] = jnp.sum(y, axis=0, keepdims=True)
    stats_ref[1:2, :] = jnp.sum(y * y, axis=0, keepdims=True)
    y_ref[...] = y.astype(y_ref.dtype)


def _bn_relu_nchw_kernel(y_ref, scale_ref, shift_ref, o_ref, *, cout, n_spatial):
    """Fused affine BN + ReLU + transpose-to-channel-major + un-pad.

    y_ref:     (P_pad, Cp) bf16 conv output for one image (rows = pixels)
    scale_ref: (1, Cp)     f32
    shift_ref: (1, Cp)     f32
    o_ref:     (Cout, P)   f32 NCHW slab for one image (channels major)
    """
    z = y_ref[...].astype(jnp.float32) * scale_ref[...] + shift_ref[...]
    z = jnp.maximum(z, 0.0)                     # (P_pad, Cp) f32
    zt = jnp.transpose(z, (1, 0))               # (Cp, P_pad) - XLU, hidden under DMA
    o_ref[...] = zt[:cout, :n_spatial]          # drop channel/row padding


# ------------------------------ host wrapper ----------------------------------

@functools.partial(jax.jit, static_argnames=("stride", "padding", "tm"))
def down_forward(x, weight, bias, gamma, beta, *, stride=2, padding=1,
                 eps=1e-5, tm=256):
    """Forward pass of `Down`.

    x:      (N, Cin, H, W)  float32 (NCHW, like PyTorch)
    weight: (Cout, Cin, K, K)
    bias:   (Cout,)   -- unused: a per-channel constant added before training-mode
                         BatchNorm cancels exactly against the batch mean.
    gamma:  (Cout,)   BatchNorm weight
    beta:   (Cout,)   BatchNorm bias
    returns (N, Cout, Ho, Wo) float32
    """
    del bias  # cancels under training-mode BN (mean subtraction); see docstring.

    N, Cin, H, W = x.shape
    Cout, _, K, _ = weight.shape
    Ho = (H + 2 * padding - K) // stride + 1
    Wo = (W + 2 * padding - K) // stride + 1
    P = Ho * Wo                # output pixels per image
    M = N * P                  # real BN sample count per channel
    Kdim = K * K * Cin

    # Lane-dense padded sizes.  256-multiples when Cout >= 128 (v6e/v7x MXU width).
    Kp = _round_up(Kdim, 128)
    Cp = _round_up(Cout, 256) if Cout >= 128 else _round_up(Cout, 128)
    # TODO(synk): for very small Cout (e.g. 8) padding to 128 lanes inflates the
    # y traffic ~16x; pack multiple output pixels per lane row if it matters.

    # Per-image spatial padding to a multiple of the matmul row tile (itself a
    # multiple of 128 so the kernel-2 transpose is on native (8,128) tiles).
    tp = min(tm, _round_up(P, 128))
    P_pad = _round_up(P, tp)
    p_tiles = P_pad // tp

    # ---- glue: im2col in plain JAX, built directly in bf16, lane-dense padded ----
    # TODO(synk): fold the K*K tap gather into kernel 1 (strided slices from a
    # VMEM slab of the padded NHWC input) to remove the K*K/stride^2 = 4x HBM
    # blow-up of `patches` and the padded-input intermediate.
    x_nhwc = jnp.transpose(x, (0, 2, 3, 1))
    xp = jnp.pad(x_nhwc, ((0, 0), (padding, padding), (padding, padding), (0, 0)))
    xp = xp.astype(jnp.bfloat16)
    taps = []
    for kh in range(K):
        for kw in range(K):
            taps.append(xp[:, kh:kh + Ho * stride:stride,
                            kw:kw + Wo * stride:stride, :])          # (N, Ho, Wo, Cin)
    patches = jnp.stack(taps, axis=3).reshape(N, P, Kdim)            # (N, P, K*K*Cin)
    patches = jnp.pad(patches, ((0, 0), (0, P_pad - P), (0, Kp - Kdim)))

    # weight (Cout, Cin, K, K) -> (K, K, Cin, Cout) -> (Kdim, Cout), matching the
    # patch tap ordering; zero-padded to (Kp, Cp); bf16 operands, f32 accumulation.
    w2 = jnp.transpose(weight, (2, 3, 1, 0)).reshape(Kdim, Cout)
    w2 = jnp.pad(w2, ((0, Kp - Kdim), (0, Cp - Cout))).astype(jnp.bfloat16)

    # ---- kernel 1: conv matmul + per-tile channel stats (fully parallel grid) ----
    # TODO(synk): on v7x, once Kp*Cp*2B approaches ~8 MiB, single-buffer the
    # resident weight (pipeline_mode=pl.Buffered(1)) and add a K grid split with
    # an f32 accumulator scratch + pl.when finalize.
    y, stats_part = pl.pallas_call(
        _conv_stats_kernel,
        out_shape=(
            jax.ShapeDtypeStruct((N, P_pad, Cp), jnp.bfloat16),       # bf16 y
            jax.ShapeDtypeStruct((N, p_tiles, 2, Cp), jnp.float32),   # per-tile stats
        ),
        grid=(N, p_tiles),
        in_specs=[
            pl.BlockSpec((None, tp, Kp), lambda n, j: (n, j, 0)),
            pl.BlockSpec((Kp, Cp), lambda n, j: (0, 0)),
        ],
        out_specs=(
            pl.BlockSpec((None, tp, Cp), lambda n, j: (n, j, 0)),
            pl.BlockSpec((None, None, 2, Cp), lambda n, j: (n, j, 0, 0)),
        ),
        compiler_params=pltpu.CompilerParams(
            dimension_semantics=("parallel", "parallel"),
            vmem_limit_bytes=40 * 1024 * 1024),
    )(patches, w2)

    # ---- fold BN (training-mode batch stats, biased variance) into scale/shift ----
    # Zero-padded patch rows produce exactly 0 in y (no bias add), so they
    # contribute nothing to the sums; divide by the real sample count M.
    stats = jnp.sum(stats_part, axis=(0, 1))            # (2, Cp)
    s = stats[0, :Cout]
    ss = stats[1, :Cout]
    mean = s / M
    var = jnp.maximum(ss / M - mean * mean, 0.0)         # biased variance (training BN)
    inv = gamma.astype(jnp.float32) * jax.lax.rsqrt(var + eps)
    scale = jnp.pad(inv, (0, Cp - Cout)).reshape(1, Cp)
    shift = jnp.pad(beta.astype(jnp.float32) - mean * inv,
                    (0, Cp - Cout)).reshape(1, Cp)

    # ---- kernel 2: fused BN affine + ReLU + transpose/un-pad to NCHW -------------
    # One full image per step (>=1024-row tiles for realistic shapes).
    # TODO(synk): split the spatial axis for very large Ho*Wo (> a few MiB/image).
    out3 = pl.pallas_call(
        functools.partial(_bn_relu_nchw_kernel, cout=Cout, n_spatial=P),
        out_shape=jax.ShapeDtypeStruct((N, Cout, P), jnp.float32),
        grid=(N,),
        in_specs=[
            pl.BlockSpec((None, P_pad, Cp), lambda n: (n, 0, 0)),
            pl.BlockSpec((1, Cp), lambda n: (0, 0)),
            pl.BlockSpec((1, Cp), lambda n: (0, 0)),
        ],
        out_specs=pl.BlockSpec((None, Cout, P), lambda n: (n, 0, 0)),
        compiler_params=pltpu.CompilerParams(
            dimension_semantics=("parallel",),
            vmem_limit_bytes=40 * 1024 * 1024),
    )(y, scale, shift)

    # (N, Cout, Ho*Wo) -> (N, Cout, Ho, Wo): contiguous metadata reshape, no copy.
    return out3.reshape(N, Cout, Ho, Wo)


# ------------------------------- reference ------------------------------------

def _ref_forward(x, weight, bias, gamma, beta, stride=2, padding=1, eps=1e-5):
    """Faithful f32 forward of the PyTorch module (conv bias included; training-mode
    BN with biased variance).  Inputs/weights are cast through bf16 to match the
    MXU operand precision used by the kernel."""
    xr = x.astype(jnp.bfloat16).astype(jnp.float32)
    wr = weight.astype(jnp.bfloat16).astype(jnp.float32)
    y = jax.lax.conv_general_dilated(
        xr, wr, window_strides=(stride, stride),
        padding=((padding, padding), (padding, padding)),
        dimension_numbers=("NCHW", "OIHW", "NCHW"),
        precision=jax.lax.Precision.HIGHEST)
    y = y + bias.reshape(1, -1, 1, 1)
    mean = y.mean(axis=(0, 2, 3), keepdims=True)
    var = y.var(axis=(0, 2, 3), keepdims=True)          # biased, as in training BN
    yn = (y - mean) * jax.lax.rsqrt(var + eps)
    yn = yn * gamma.reshape(1, -1, 1, 1) + beta.reshape(1, -1, 1, 1)
    return jnp.maximum(yn, 0.0)


# --------------------------------- main ----------------------------------------

if __name__ == "__main__":
    key = jax.random.PRNGKey(0)
    k_x, k_w, k_b, k_g, k_be = jax.random.split(key, 5)

    N, Cin, H, W = 2, 4, 16, 16
    Cout, K = 8, 4

    x = jax.random.normal(k_x, (N, Cin, H, W), dtype=jnp.float32)
    # Deterministic synthetic parameters (Conv2d + BatchNorm2d shapes).
    fan_in = Cin * K * K
    bound = 1.0 / (fan_in ** 0.5)
    weight = jax.random.uniform(k_w, (Cout, Cin, K, K), jnp.float32, -bound, bound)
    bias = jax.random.uniform(k_b, (Cout,), jnp.float32, -bound, bound)
    gamma = 1.0 + 0.1 * jax.random.normal(k_g, (Cout,), jnp.float32)
    beta = 0.1 * jax.random.normal(k_be, (Cout,), jnp.float32)

    out = down_forward(x, weight, bias, gamma, beta)
    out = jax.block_until_ready(out)

    ref = _ref_forward(x, weight, bias, gamma, beta)
    assert out.shape == (N, Cout, H // 2, W // 2), out.shape
    max_err = float(jnp.abs(out - ref).max())
    # Tolerance budget: the conv intermediate is stored in bf16 (<= 2^-8 relative
    # on y, ~1e-2 absolute after BN normalization at these scales); everything
    # else (f32 stats, MXU f32 accumulation, bias cancellation) matches tightly.
    assert jnp.allclose(out, ref, atol=3e-2, rtol=3e-2), max_err

    print("KERNEL_OK")
</pallas_src>

<mosaic_0001>
module attributes {stable_mosaic.version = 11 : i64} {
  func.func @_conv_stats_kernel(%arg0: i32, %arg1: i32, %arg2: memref<1x128x128xbf16, #tpu.memory_space<vmem>>, %arg3: memref<128x128xbf16, #tpu.memory_space<vmem>>, %arg4: memref<1x128x128xbf16, #tpu.memory_space<vmem>>, %arg5: memref<1x1x2x128xf32, #tpu.memory_space<vmem>>) attributes {dimension_semantics = [#tpu.dimension_semantics<parallel>, #tpu.dimension_semantics<parallel>], iteration_bounds = array<i64: 2, 1>, scalar_prefetch = 0 : i64, scratch_operands = 0 : i64, tpu.core_type = #tpu.core_type<tc>, window_params = [{transform_indices = @transform_0, window_bounds = array<i64: 1, 128, 128>}, {pipeline_mode = #tpu.pipeline_mode<synchronous>, transform_indices = @transform_1, window_bounds = array<i64: 128, 128>}, {transform_indices = @transform_2, window_bounds = array<i64: 1, 128, 128>}, {transform_indices = @transform_3, window_bounds = array<i64: 1, 1, 2, 128>}]} {
    %c0 = arith.constant 0 : index
    %c0_0 = arith.constant 0 : index
    %c0_1 = arith.constant 0 : index
    %0 = vector.load %arg2[%c0, %c0_0, %c0_1] : memref<1x128x128xbf16, #tpu.memory_space<vmem>>, vector<1x128x128xbf16>
    %1 = vector.shape_cast %0 : vector<1x128x128xbf16> to vector<128x128xbf16>
    %c0_2 = arith.constant 0 : index
    %c0_3 = arith.constant 0 : index
    %2 = vector.load %arg3[%c0_2, %c0_3] : memref<128x128xbf16, #tpu.memory_space<vmem>>, vector<128x128xbf16>
    %cst = arith.constant dense<0.000000e+00> : vector<128x128xf32>
    %3 = tpu.matmul %1, %2, %cst {dimension_numbers = #tpu.dot_dimension_numbers<[1], [0], [0], [1], [0, 0, 1, 1], [], []>} : vector<128x128xbf16>, vector<128x128xbf16>, vector<128x128xf32> -> vector<128x128xf32>
    %cst_4 = arith.constant dense<0.000000e+00> : vector<128xf32>
    %4 = vector.multi_reduction <add>, %3, %cst_4 [0] : vector<128x128xf32> to vector<128xf32>
    %5 = vector.shape_cast %4 : vector<128xf32> to vector<1x128xf32>
    %c0_5 = arith.constant 0 : index
    %c0_6 = arith.constant 0 : index
    %c0_7 = arith.constant 0 : index
    %c0_8 = arith.constant 0 : index
    %6 = vector.load %arg5[%c0_5, %c0_6, %c0_7, %c0_8] : memref<1x1x2x128xf32, #tpu.memory_space<vmem>>, vector<1x1x1x128xf32>
    %7 = vector.shape_cast %6 : vector<1x1x1x128xf32> to vector<1x128xf32>
    %8 = vector.shape_cast %5 : vector<1x128xf32> to vector<1x1x1x128xf32>
    tpu.vector_store %arg5[%c0_5, %c0_6, %c0_7, %c0_8], %8 {strides = array<i32>} : memref<1x1x2x128xf32, #tpu.memory_space<vmem>>, vector<1x1x1x128xf32>,
    %9 = arith.mulf %3, %3 : vector<128x128xf32>
    %cst_9 = arith.constant dense<0.000000e+00> : vector<128xf32>
    %10 = vector.multi_reduction <add>, %9, %cst_9 [0] : vector<128x128xf32> to vector<128xf32>
    %11 = vector.shape_cast %10 : vector<128xf32> to vector<1x128xf32>
    %c0_10 = arith.constant 0 : index
    %c0_11 = arith.constant 0 : index
    %c1 = arith.constant 1 : index
    %c0_12 = arith.constant 0 : index
    %12 = vector.load %arg5[%c0_10, %c0_11, %c1, %c0_12] : memref<1x1x2x128xf32, #tpu.memory_space<vmem>>, vector<1x1x1x128xf32>
    %13 = vector.shape_cast %12 : vector<1x1x1x128xf32> to vector<1x128xf32>
    %14 = vector.shape_cast %11 : vector<1x128xf32> to vector<1x1x1x128xf32>
    tpu.vector_store %arg5[%c0_10, %c0_11, %c1, %c0_12], %14 {strides = array<i32>} : memref<1x1x2x128xf32, #tpu.memory_space<vmem>>, vector<1x1x1x128xf32>,
    %15 = arith.truncf %3 : vector<128x128xf32> to vector<128x128xbf16>
    %c0_13 = arith.constant 0 : index
    %c0_14 = arith.constant 0 : index
    %c0_15 = arith.constant 0 : index
    %16 = vector.load %arg4[%c0_13, %c0_14, %c0_15] : memref<1x128x128xbf16, #tpu.memory_space<vmem>>, vector<1x128x128xbf16>
    %17 = vector.shape_cast %16 : vector<1x128x128xbf16> to vector<128x128xbf16>
    %18 = vector.shape_cast %15 : vector<128x128xbf16> to vector<1x128x128xbf16>
    tpu.vector_store %arg4[%c0_13, %c0_14, %c0_15], %18 {strides = array<i32>} : memref<1x128x128xbf16, #tpu.memory_space<vmem>>, vector<1x128x128xbf16>,
    return
  }
  func.func @transform_0(%arg0: i32, %arg1: i32) -> (i32, i32, i32) {
    %c0_i32 = arith.constant 0 : i32
    %c0_i32_0 = arith.constant 0 : i32
    return %arg0, %arg1, %c0_i32 : i32, i32, i32
  }
  func.func @transform_1(%arg0: i32, %arg1: i32) -> (i32, i32) {
    %c0_i32 = arith.constant 0 : i32
    %c0_i32_0 = arith.constant 0 : i32
    %c0_i32_1 = arith.constant 0 : i32
    return %c0_i32, %c0_i32_0 : i32, i32
  }
  func.func @transform_2(%arg0: i32, %arg1: i32) -> (i32, i32, i32) {
    %c0_i32 = arith.constant 0 : i32
    %c0_i32_0 = arith.constant 0 : i32
    return %arg0, %arg1, %c0_i32 : i32, i32, i32
  }
  func.func @transform_3(%arg0: i32, %arg1: i32) -> (i32, i32, i32, i32) {
    %c0_i32 = arith.constant 0 : i32
    %c0_i32_0 = arith.constant 0 : i32
    %c0_i32_1 = arith.constant 0 : i32
    return %arg0, %arg1, %c0_i32, %c0_i32_0 : i32, i32, i32, i32
  }
}

module attributes {stable_mosaic.version = 11 : i64} {
  func.func @_bn_relu_nchw_kernel(%arg0: i32, %arg1: memref<1x128x128xbf16, #tpu.memory_space<vmem>>, %arg2: memref<1x128xf32, #tpu.memory_space<vmem>>, %arg3: memref<1x128xf32, #tpu.memory_space<vmem>>, %arg4: memref<1x8x64xf32, #tpu.memory_space<vmem>>) attributes {dimension_semantics = [#tpu.dimension_semantics<parallel>], iteration_bounds = array<i64: 2>, scalar_prefetch = 0 : i64, scratch_operands = 0 : i64, tpu.core_type = #tpu.core_type<tc>, window_params = [{transform_indices = @transform_0, window_bounds = array<i64: 1, 128, 128>}, {pipeline_mode = #tpu.pipeline_mode<synchronous>, transform_indices = @transform_1, window_bounds = array<i64: 1, 128>}, {pipeline_mode = #tpu.pipeline_mode<synchronous>, transform_indices = @transform_2, window_bounds = array<i64: 1, 128>}, {transform_indices = @transform_3, window_bounds = array<i64: 1, 8, 64>}]} {
    %c0 = arith.constant 0 : index
    %c0_0 = arith.constant 0 : index
    %c0_1 = arith.constant 0 : index
    %0 = vector.load %arg1[%c0, %c0_0, %c0_1] : memref<1x128x128xbf16, #tpu.memory_space<vmem>>, vector<1x128x128xbf16>
    %1 = vector.shape_cast %0 : vector<1x128x128xbf16> to vector<128x128xbf16>
    %2 = arith.extf %1 : vector<128x128xbf16> to vector<128x128xf32>
    %c0_2 = arith.constant 0 : index
    %c0_3 = arith.constant 0 : index
    %3 = vector.load %arg2[%c0_2, %c0_3] : memref<1x128xf32, #tpu.memory_space<vmem>>, vector<1x128xf32>
    %4 = vector.broadcast %3 : vector<1x128xf32> to vector<128x128xf32>
    %5 = arith.mulf %2, %4 : vector<128x128xf32>
    %c0_4 = arith.constant 0 : index
    %c0_5 = arith.constant 0 : index
    %6 = vector.load %arg3[%c0_4, %c0_5] : memref<1x128xf32, #tpu.memory_space<vmem>>, vector<1x128xf32>
    %7 = vector.broadcast %6 : vector<1x128xf32> to vector<128x128xf32>
    %8 = arith.addf %5, %7 : vector<128x128xf32>
    %cst = arith.constant 0.000000e+00 : f32
    %9 = vector.broadcast %cst : f32 to vector<128x128xf32>
    %10 = arith.maximumf %8, %9 : vector<128x128xf32>
    %11 = tpu.transpose %10, [1, 0] : vector<128x128xf32> -> vector<128x128xf32>
    %12 = vector.extract_strided_slice %11 {offsets = [0, 0], sizes = [8, 64], strides = [1, 1]} : vector<128x128xf32> to vector<8x64xf32>
    %c0_6 = arith.constant 0 : index
    %c0_7 = arith.constant 0 : index
    %c0_8 = arith.constant 0 : index
    %13 = vector.load %arg4[%c0_6, %c0_7, %c0_8] : memref<1x8x64xf32, #tpu.memory_space<vmem>>, vector<1x8x64xf32>
    %14 = vector.shape_cast %13 : vector<1x8x64xf32> to vector<8x64xf32>
    %15 = vector.shape_cast %12 : vector<8x64xf32> to vector<1x8x64xf32>
    tpu.vector_store %arg4[%c0_6, %c0_7, %c0_8], %15 {strides = array<i32>} : memref<1x8x64xf32, #tpu.memory_space<vmem>>, vector<1x8x64xf32>,
    return
  }
  func.func @transform_0(%arg0: i32) -> (i32, i32, i32) {
    %c0_i32 = arith.constant 0 : i32
    %c0_i32_0 = arith.constant 0 : i32
    %c0_i32_1 = arith.constant 0 : i32
    return %arg0, %c0_i32, %c0_i32_0 : i32, i32, i32
  }
  func.func @transform_1(%arg0: i32) -> (i32, i32) {
    %c0_i32 = arith.constant 0 : i32
    %c0_i32_0 = arith.constant 0 : i32
    %c0_i32_1 = arith.constant 0 : i32
    return %c0_i32, %c0_i32_0 : i32, i32
  }
  func.func @transform_2(%arg0: i32) -> (i32, i32) {
    %c0_i32 = arith.constant 0 : i32
    %c0_i32_0 = arith.constant 0 : i32
    %c0_i32_1 = arith.constant 0 : i32
    return %c0_i32, %c0_i32_0 : i32, i32
  }
  func.func @transform_3(%arg0: i32) -> (i32, i32, i32) {
    %c0_i32 = arith.constant 0 : i32
    %c0_i32_0 = arith.constant 0 : i32
    %c0_i32_1 = arith.constant 0 : i32
    return %arg0, %c0_i32, %c0_i32_0 : i32, i32, i32
  }
}

</mosaic_0001>

<llo_original>
// kernel: down_forward.3
$region0: #{down_forward.3}
  #allocation0 [shape = 'u32[]', space=smem, size = 0x4, offset = 0x4, fixed_abs, tag = 'smem constant byte address 0x4 - core index']
  #allocation1 [shape = 'u32[72,128]{1,0:T(1,128)}', space=vmem, size = 0x9000, scoped, tag = 'internal scratch']
  %s0 = inlined_call_operand.vmem [shape: bf16[2,128,128], index: 0, kind: input, shape index: {}]
  %s1 = inlined_call_operand.vmem [shape: f32[1,128], index: 1, kind: input, shape index: {}]
  %s2 = inlined_call_operand.vmem [shape: f32[1,128], index: 2, kind: input, shape index: {}]
  %s3 = inlined_call_operand.vmem [shape: f32[2,8,64], index: 3, kind: output, shape index: {}]
  %s4 = sld [smem:[#allocation0]]
  $region45: #{down_forward.3} parent=0
    _
  %s6 = ssub.s32 1, %s4
  %s7 = scalar_select 0, %s6, %s4
  loop: start=0, step=1, limit=4
  $region2: #{down_forward.3} parent=0 // loop_pre_header
    _
  $region3: #{down_forward.3} parent=0 // loop_header
    %s9 = sphi 0, %s13
    %p10 = scmp.ge.s32.totalorder %s9, 4
    %s19 = sphi 0, %s21
    %s22 = sphi 0, %s19
    %s23 = sphi 0, %s22
    %s39 = sphi 0, %s23
    %s43 = sphi 0, %s43
    %s45 = sphi 0, %s43
    %s46 = sphi 0, %s45
    %s60 = sphi 0, %s46
    %s64 = sphi 0, %s64
    %s66 = sphi 0, %s64
    %s67 = sphi 0, %s66
    %s81 = sphi 0, %s67
    %s87 = sphi 0, %s89
    %s90 = sphi 0, %s87
    %s91 = sphi 0, %s90
    %s107 = sphi 0, %s91
  $region4: #{down_forward.3} parent=0 // loop_header_branch
    %12 = sbr.rel (%p10) target = $region8
  $region5: #{down_forward.3} parent=0 // loop_body
    %s14 = ssub.s32 %s9, 1
    %s15 = ssub.s32 %s9, 2
    %s16 = sadd.s32 %s9, 1
    %s17 = ssub.s32 %s9, %s16
    %p18 = scmp.eq.s32.totalorder %s17, 0
    %s20 = sadd.s32 %s19, 1
    %s21 = scalar_select %p18, %s19, %s20
    %p24 = pneg %p18
    %p25 = scmp.eq.s32.totalorder %s9, 1
    %p26 = por %p24, %p25
    %p27 = scmp.ne.s32.totalorder %s19, %s22
    %p28 = scmp.eq.s32.totalorder %s9, 0
    %p29 = por %p27, %p28
    %p30 = scmp.ne.s32.totalorder %s19, %s22
    %p31 = scmp.eq.s32.totalorder %s14, 1
    %p32 = por %p30, %p31
    %p33 = scmp.ne.s32.totalorder %s22, %s23
    %p34 = scmp.eq.s32.totalorder %s14, 0
    %p35 = por %p33, %p34
    %p36 = scmp.ne.s32.totalorder %s22, %s23
    %p37 = scmp.eq.s32.totalorder %s15, 1
    %p38 = por %p36, %p37
    %p40 = scmp.ne.s32.totalorder %s23, %s39
    %p41 = scmp.eq.s32.totalorder %s15, 0
    %p42 = por %p40, %p41
    %s44 = sadd.s32 %s43, 1
    %p47 = scmp.eq.s32.totalorder %s9, 1
    %p48 = scmp.ne.s32.totalorder %s43, %s45
    %p49 = scmp.eq.s32.totalorder %s9, 0
    %p50 = por %p48, %p49
    %p51 = scmp.ne.s32.totalorder %s43, %s45
    %p52 = scmp.eq.s32.totalorder %s14, 1
    %p53 = por %p51, %p52
    %p54 = scmp.ne.s32.totalorder %s45, %s46
    %p55 = scmp.eq.s32.totalorder %s14, 0
    %p56 = por %p54, %p55
    %p57 = scmp.ne.s32.totalorder %s45, %s46
    %p58 = scmp.eq.s32.totalorder %s15, 1
    %p59 = por %p57, %p58
    %p61 = scmp.ne.s32.totalorder %s46, %s60
    %p62 = scmp.eq.s32.totalorder %s15, 0
    %p63 = por %p61, %p62
    %s65 = sadd.s32 %s64, 1
    %p68 = scmp.eq.s32.totalorder %s9, 1
    %p69 = scmp.ne.s32.totalorder %s64, %s66
    %p70 = scmp.eq.s32.totalorder %s9, 0
    %p71 = por %p69, %p70
    %p72 = scmp.ne.s32.totalorder %s64, %s66
    %p73 = scmp.eq.s32.totalorder %s14, 1
    %p74 = por %p72, %p73
    %p75 = scmp.ne.s32.totalorder %s66, %s67
    %p76 = scmp.eq.s32.totalorder %s14, 0
    %p77 = por %p75, %p76
    %p78 = scmp.ne.s32.totalorder %s66, %s67
    %p79 = scmp.eq.s32.totalorder %s15, 1
    %p80 = por %p78, %p79
    %p82 = scmp.ne.s32.totalorder %s67, %s81
    %p83 = scmp.eq.s32.totalorder %s15, 0
    %p84 = por %p82, %p83
    %s85 = ssub.s32 %s9, %s16
    %p86 = scmp.eq.s32.totalorder %s85, 0
    %s88 = sadd.s32 %s87, 1
    %s89 = scalar_select %p86, %s87, %s88
    %p92 = pneg %p86
    %p93 = scmp.eq.s32.totalorder %s9, 1
    %p94 = por %p92, %p93
    %p95 = scmp.ne.s32.totalorder %s87, %s90
    %p96 = scmp.eq.s32.totalorder %s9, 0
    %p97 = por %p95, %p96
    %p98 = scmp.ne.s32.totalorder %s87, %s90
    %p99 = scmp.eq.s32.totalorder %s14, 1
    %p100 = por %p98, %p99
    %p101 = scmp.ne.s32.totalorder %s90, %s91
    %p102 = scmp.eq.s32.totalorder %s14, 0
    %p103 = por %p101, %p102
    %p104 = scmp.ne.s32.totalorder %s90, %s91
    %p105 = scmp.eq.s32.totalorder %s15, 1
    %p106 = por %p104, %p105
    %p108 = scmp.ne.s32.totalorder %s91, %s107
    %p109 = scmp.eq.s32.totalorder %s15, 0
    %p110 = por %p108, %p109
    %p111 = scmp.le.s32.totalorder 1, %s9
    %p112 = scmp.lt.s32.totalorder %s9, 3
    %p113 = pnand %p111, %p112
    %p114 = pneg %p113
    // Predicated region
    $region9: #{down_forward.3} parent=5 // pred_check
      _
    $region10: #{down_forward.3} parent=5 // pred_check_branch
      %116 = sbr.rel (%p113) target = $region12
    $region11: #{down_forward.3} parent=5 // pred_region
      %s117 = ssub.s32 %s9, 1
      // Predicated region
      $region13: #{down_forward.3} parent=11 // pred_check
        %p118 = pneg %p56
      $region14: #{down_forward.3} parent=11 // pred_check_branch
        %120 = sbr.rel (%p118) target = $region16
      $region15: #{down_forward.3} parent=11 // pred_region
        _
      $region16: #{down_forward.3} parent=11 // pred_fallthru
        _
      // Predicated region
      $region17: #{down_forward.3} parent=11 // pred_check
        %p121 = pneg %p77
      $region18: #{down_forward.3} parent=11 // pred_check_branch
        %123 = sbr.rel (%p121) target = $region20
      $region19: #{down_forward.3} parent=11 // pred_region
        _
      $region20: #{down_forward.3} parent=11 // pred_fallthru
        _
    $region12: #{down_forward.3} parent=5 // pred_fallthru
      _
    %p124 = scmp.lt.s32.totalorder %s9, 2
    // Predicated region
    $region21: #{down_forward.3} parent=5 // pred_check
      %p125 = pneg %p124
    $region22: #{down_forward.3} parent=5 // pred_check_branch
      %127 = sbr.rel (%p125) target = $region24
    $region23: #{down_forward.3} parent=5 // pred_region
      // Predicated region
      $region25: #{down_forward.3} parent=23 // pred_check
        %p128 = pneg %p29
      $region26: #{down_forward.3} parent=23 // pred_check_branch
        %130 = sbr.rel (%p128) target = $region28
      $region27: #{down_forward.3} parent=23 // pred_region
        %p131 = scmp.lt.s32.totalorder %s9, 1
        %s132 = scalar_select %p131, %s9, 1
        %s133 = smul.addr %s132, 16
        %s134 = smul.addr %s133, 4
        %s135 = scalar_lea.vmem %s0, %s134
      $region28: #{down_forward.3} parent=23 // pred_fallthru
        _
    $region24: #{down_forward.3} parent=5 // pred_fallthru
      _
    %p136 = scmp.le.s32.totalorder 1, %s9
    %p137 = scmp.lt.s32.totalorder %s9, 3
    %p138 = pnand %p136, %p137
    %p139 = pneg %p138
    // Predicated region
    $region29: #{down_forward.3} parent=5 // pred_check
      _
    $region30: #{down_forward.3} parent=5 // pred_check_branch
      %141 = sbr.rel (%p138) target = $region32
    $region31: #{down_forward.3} parent=5 // pred_region
      %s142 = ssub.s32 %s9, 1
      %p143 = scmp.lt.s32.totalorder %s14, 1
      %s144 = scalar_select %p143, %s14, 1
      %s145 = smul.addr %s144, 16
      %s146 = smul.addr %s145, 4
      %s147 = scalar_lea.vmem %s0, %s146
      %p148 = pneg %p35
      %p149 = pneg %p32
      %p150 = pneg %p56
      %p151 = pneg %p53
      %p152 = pneg %p77
      %p153 = pneg %p74
      %p154 = pneg %p103
      %p155 = pneg %p100
      %p156 = scmp.lt.s32.totalorder %s14, 1
      %s157 = scalar_select %p156, %s14, 1
      %s158 = smul.addr %s157, 8
      %s159 = scalar_lea.vmem %s3, %s158
      %p160 = scmp.lt.s32.totalorder %s14, 1
      %s161 = scalar_select %p160, %s14, 1
      %s162 = smul.addr %s161, 16
      %s163 = smul.addr %s162, 4
      %s164 = scalar_lea.vmem %s0, %s163
      %p165 = scmp.lt.s32.totalorder %s14, 1
      %s166 = scalar_select %p165, %s14, 1
      %s167 = smul.addr %s166, 8
      %s168 = scalar_lea.vmem %s3, %s167
      %v169 = vld [vmem:[%s164] sm:$0xf]
      %v170 = vld [vmem:[%s164 + $0x4] sm:$0xf]
      %v171 = vld [vmem:[%s164 + $0x8] sm:$0xf]
      %v172 = vld [vmem:[%s164 + $0xc] sm:$0xf]
      %v173 = vld [vmem:[%s164 + $0x10] sm:$0xf]
      %v174 = vld [vmem:[%s164 + $0x14] sm:$0xf]
      %v175 = vld [vmem:[%s164 + $0x18] sm:$0xf]
      %v176 = vld [vmem:[%s164 + $0x1c] sm:$0xf]
      %v177 = vld [vmem:[%s164 + $0x20] sm:$0xf]
      %v178 = vld [vmem:[%s164 + $0x24] sm:$0xf]
      %v179 = vld [vmem:[%s164 + $0x28] sm:$0xf]
      %v180 = vld [vmem:[%s164 + $0x2c] sm:$0xf]
      %v181 = vld [vmem:[%s164 + $0x30] sm:$0xf]
      %v182 = vld [vmem:[%s164 + $0x34] sm:$0xf]
      %v183 = vld [vmem:[%s164 + $0x38] sm:$0xf]
      %v184 = vld [vmem:[%s164 + $0x3c] sm:$0xf]
      %v185 = vunpack.c.l.bf16 %v169
      %v186 = vunpack.c.l.bf16 %v170
      %v187 = vunpack.c.l.bf16 %v171
      %v188 = vunpack.c.l.bf16 %v172
      %v189 = vunpack.c.l.bf16 %v173
      %v190 = vunpack.c.l.bf16 %v174
      %v191 = vunpack.c.l.bf16 %v175
      %v192 = vunpack.c.l.bf16 %v176
      %v193 = vunpack.c.l.bf16 %v177
      %v194 = vunpack.c.l.bf16 %v178
      %v195 = vunpack.c.l.bf16 %v179
      %v196 = vunpack.c.l.bf16 %v180
      %v197 = vunpack.c.l.bf16 %v181
      %v198 = vunpack.c.l.bf16 %v182
      %v199 = vunpack.c.l.bf16 %v183
      %v200 = vunpack.c.l.bf16 %v184
      %v201 = vld [vmem:[%s1] sm:$0x1]
      %v203 = vperm.slane %v201, 0
      %v205 = vmul.f32 %v185, %v203
      %v206 = vmul.f32 %v186, %v203
      %v207 = vmul.f32 %v187, %v203
      %v208 = vmul.f32 %v188, %v203
      %v209 = vmul.f32 %v189, %v203
      %v210 = vmul.f32 %v190, %v203
      %v211 = vmul.f32 %v191, %v203
      %v212 = vmul.f32 %v192, %v203
      %v213 = vmul.f32 %v193, %v203
      %v214 = vmul.f32 %v194, %v203
      %v215 = vmul.f32 %v195, %v203
      %v216 = vmul.f32 %v196, %v203
      %v217 = vmul.f32 %v197, %v203
      %v218 = vmul.f32 %v198, %v203
      %v219 = vmul.f32 %v199, %v203
      %v220 = vmul.f32 %v200, %v203
      %v221 = vld [vmem:[%s2] sm:$0x1]
      %v223 = vperm.slane %v221, 0
      %v225 = vadd.f32 %v205, %v223
      %v226 = vadd.f32 %v206, %v223
      %v227 = vadd.f32 %v207, %v223
      %v228 = vadd.f32 %v208, %v223
      %v229 = vadd.f32 %v209, %v223
      %v230 = vadd.f32 %v210, %v223
      %v231 = vadd.f32 %v211, %v223
      %v232 = vadd.f32 %v212, %v223
      %v233 = vadd.f32 %v213, %v223
      %v234 = vadd.f32 %v214, %v223
      %v235 = vadd.f32 %v215, %v223
      %v236 = vadd.f32 %v216, %v223
      %v237 = vadd.f32 %v217, %v223
      %v238 = vadd.f32 %v218, %v223
      %v239 = vadd.f32 %v219, %v223
      %v240 = vadd.f32 %v220, %v223
      %v241 = vmax.f32 %v225, 0.0
      %v242 = vmax.f32 %v226, 0.0
      %v243 = vmax.f32 %v227, 0.0
      %v244 = vmax.f32 %v228, 0.0
      %v245 = vmax.f32 %v229, 0.0
      %v246 = vmax.f32 %v230, 0.0
      %v247 = vmax.f32 %v231, 0.0
      %v248 = vmax.f32 %v232, 0.0
      %v249 = vmax.f32 %v233, 0.0
      %v250 = vmax.f32 %v234, 0.0
      %v251 = vmax.f32 %v235, 0.0
      %v252 = vmax.f32 %v236, 0.0
      %v253 = vmax.f32 %v237, 0.0
      %v254 = vmax.f32 %v238, 0.0
      %v255 = vmax.f32 %v239, 0.0
      %v256 = vmax.f32 %v240, 0.0
      %257 = vxpose.xlu0.b32.start [1/16] %v241, 128
      %258 = vxpose.xlu0.b32.cont [2/16] %v242, 128
      %259 = vxpose.xlu0.b32.cont [3/16] %v243, 128
      %260 = vxpose.xlu0.b32.cont [4/16] %v244, 128
      %261 = vxpose.xlu0.b32.cont [5/16] %v245, 128
      %262 = vxpose.xlu0.b32.cont [6/16] %v246, 128
      %263 = vxpose.xlu0.b32.cont [7/16] %v247, 128
      %264 = vxpose.xlu0.b32.cont [8/16] %v248, 128
      %265 = vxpose.xlu0.b32.cont [9/16] %v249, 128
      %266 = vxpose.xlu0.b32.cont [10/16] %v250, 128
      %267 = vxpose.xlu0.b32.cont [11/16] %v251, 128
      %268 = vxpose.xlu0.b32.cont [12/16] %v252, 128
      %269 = vxpose.xlu0.b32.cont [13/16] %v253, 128
      %270 = vxpose.xlu0.b32.cont [14/16] %v254, 128
      %271 = vxpose.xlu0.b32.cont [15/16] %v255, 128
      %272 = vxpose.xlu0.b32.end [16/16] %v256, 128
      %v273 = vpop.trf.xlu0
      %v274 = vpop.trf.xlu0
      %v275 = vpop.trf.xlu0
      %v276 = vpop.trf.xlu0
      %v277 = vpop.trf.xlu0
      %v278 = vpop.trf.xlu0
      %v279 = vpop.trf.xlu0
      %v280 = vpop.trf.xlu0
      %v281 = vpop.trf.xlu0
      %v282 = vpop.trf.xlu0
      %v283 = vpop.trf.xlu0
      %v284 = vpop.trf.xlu0
      %v285 = vpop.trf.xlu0
      %v286 = vpop.trf.xlu0
      %v287 = vpop.trf.xlu0
      %v288 = vpop.trf.xlu0
      %vm289 = vcmask 523264
      %290 = vst.msk [vmem:[%s168] sm:$0xff] %vm289, %v273
      %p291 = scmp.lt.s32.totalorder %s14, 1
      %s292 = scalar_select %p291, %s14, 1
      %s293 = smul.addr %s292, 8
      %s294 = scalar_lea.vmem %s3, %s293
      // Predicated region
      $region33: #{down_forward.3} parent=31 // pred_check
        %p295 = pneg %p100
      $region34: #{down_forward.3} parent=31 // pred_check_branch
        %297 = sbr.rel (%p295) target = $region36
      $region35: #{down_forward.3} parent=31 // pred_region
        _
      $region36: #{down_forward.3} parent=31 // pred_fallthru
        _
    $region32: #{down_forward.3} parent=5 // pred_fallthru
      _
    %p298 = scmp.le.s32.totalorder 2, %s9
    // Predicated region
    $region37: #{down_forward.3} parent=5 // pred_check
      %p299 = pneg %p298
    $region38: #{down_forward.3} parent=5 // pred_check_branch
      %301 = sbr.rel (%p299) target = $region40
    $region39: #{down_forward.3} parent=5 // pred_region
      %s302 = ssub.s32 %s9, 2
      // Predicated region
      $region41: #{down_forward.3} parent=39 // pred_check
        %p303 = pneg %p106
      $region42: #{down_forward.3} parent=39 // pred_check_branch
        %305 = sbr.rel (%p303) target = $region44
      $region43: #{down_forward.3} parent=39 // pred_region
        %p306 = scmp.lt.s32.totalorder %s15, 1
        %s307 = scalar_select %p306, %s15, 1
        %s308 = smul.addr %s307, 8
        %s309 = scalar_lea.vmem %s3, %s308
      $region44: #{down_forward.3} parent=39 // pred_fallthru
        _
    $region40: #{down_forward.3} parent=5 // pred_fallthru
      _
  $region6: #{down_forward.3} parent=0 // loop_footer
    %s13 = sadd.s32 1, %s9
  $region7: #{down_forward.3} parent=0 // loop_footer_branch
    %8 = sbr.rel target = $region3
  $region8: #{down_forward.3} parent=0 // loop_exit
    _

// kernel: down_forward.2
$region0: #{down_forward.2}
  #allocation0 [shape = 'u32[]', space=smem, size = 0x4, offset = 0x4, fixed_abs, tag = 'smem constant byte address 0x4 - core index']
  #allocation1 [shape = 'u32[72,128]{1,0:T(1,128)}', space=vmem, size = 0x9000, scoped, tag = 'internal scratch']
  %s0 = inlined_call_operand.vmem [shape: bf16[2,128,128], index: 0, kind: input, shape index: {}]
  %s1 = inlined_call_operand.vmem [shape: bf16[128,128], index: 1, kind: input, shape index: {}]
  %s2 = inlined_call_operand.vmem [shape: bf16[2,128,128], index: 2, kind: output, shape index: {0}]
  %s3 = inlined_call_operand.vmem [shape: f32[2,1,2,128], index: 3, kind: output, shape index: {1}]
  %4 = xla_tuple %s2, %s3
  %s5 = sld [smem:[#allocation0]]
  $region49: #{down_forward.2} parent=0
    _
  %s7 = ssub.s32 1, %s5
  %s8 = scalar_select 0, %s7, %s5
  loop: start=0, step=1, limit=4
  $region2: #{down_forward.2} parent=0 // loop_pre_header
    _
  $region3: #{down_forward.2} parent=0 // loop_header
    %s10 = sphi 0, %s14
    %p11 = scmp.ge.s32.totalorder %s10, 4
    %s17 = sphi 0, %s29
    %s18 = sphi 0, %s25
    %s19 = sphi 0, %s17
    %s20 = sphi 0, %s18
    %s21 = sphi 0, %s19
    %s22 = sphi 0, %s20
    %s34 = sphi 0, %s36
    %s37 = sphi 0, %s34
    %s38 = sphi 0, %s37
    %s54 = sphi 0, %s38
    %s58 = sphi 0, %s58
    %s60 = sphi 0, %s58
    %s61 = sphi 0, %s60
    %s75 = sphi 0, %s61
    %s83 = sphi 0, %s85
    %s86 = sphi 0, %s83
    %s87 = sphi 0, %s86
    %s103 = sphi 0, %s87
    %s111 = sphi 0, %s113
    %s114 = sphi 0, %s111
    %s115 = sphi 0, %s114
    %s131 = sphi 0, %s115
  $region4: #{down_forward.2} parent=0 // loop_header_branch
    %13 = sbr.rel (%p11) target = $region8
  $region5: #{down_forward.2} parent=0 // loop_body
    %s15 = ssub.s32 %s10, 1
    %s16 = ssub.s32 %s10, 2
    %s23 = sadd.s32 1, %s18
    %p24 = scmp.ge.s32.totalorder %s23, 1
    %s25 = scalar_select %p24, 0, %s23
    %s26 = sadd.s32 1, %s17
    %s27 = scalar_select %p24, %s26, %s17
    %p28 = scmp.ge.s32.totalorder %s27, 2
    %s29 = scalar_select %p28, 0, %s27
    %s30 = ssub.s32 %s17, %s29
    %s31 = ssub.s32 %s18, %s25
    %s32 = sor.u32 %s30, %s31
    %p33 = scmp.eq.s32.totalorder %s32, 0
    %s35 = sadd.s32 %s34, 1
    %s36 = scalar_select %p33, %s34, %s35
    %p39 = pneg %p33
    %p40 = scmp.eq.s32.totalorder %s10, 1
    %p41 = por %p39, %p40
    %p42 = scmp.ne.s32.totalorder %s34, %s37
    %p43 = scmp.eq.s32.totalorder %s10, 0
    %p44 = por %p42, %p43
    %p45 = scmp.ne.s32.totalorder %s34, %s37
    %p46 = scmp.eq.s32.totalorder %s15, 1
    %p47 = por %p45, %p46
    %p48 = scmp.ne.s32.totalorder %s37, %s38
    %p49 = scmp.eq.s32.totalorder %s15, 0
    %p50 = por %p48, %p49
    %p51 = scmp.ne.s32.totalorder %s37, %s38
    %p52 = scmp.eq.s32.totalorder %s16, 1
    %p53 = por %p51, %p52
    %p55 = scmp.ne.s32.totalorder %s38, %s54
    %p56 = scmp.eq.s32.totalorder %s16, 0
    %p57 = por %p55, %p56
    %s59 = sadd.s32 %s58, 1
    %p62 = scmp.eq.s32.totalorder %s10, 1
    %p63 = scmp.ne.s32.totalorder %s58, %s60
    %p64 = scmp.eq.s32.totalorder %s10, 0
    %p65 = por %p63, %p64
    %p66 = scmp.ne.s32.totalorder %s58, %s60
    %p67 = scmp.eq.s32.totalorder %s15, 1
    %p68 = por %p66, %p67
    %p69 = scmp.ne.s32.totalorder %s60, %s61
    %p70 = scmp.eq.s32.totalorder %s15, 0
    %p71 = por %p69, %p70
    %p72 = scmp.ne.s32.totalorder %s60, %s61
    %p73 = scmp.eq.s32.totalorder %s16, 1
    %p74 = por %p72, %p73
    %p76 = scmp.ne.s32.totalorder %s61, %s75
    %p77 = scmp.eq.s32.totalorder %s16, 0
    %p78 = por %p76, %p77
    %s79 = ssub.s32 %s17, %s29
    %s80 = ssub.s32 %s18, %s25
    %s81 = sor.u32 %s79, %s80
    %p82 = scmp.eq.s32.totalorder %s81, 0
    %s84 = sadd.s32 %s83, 1
    %s85 = scalar_select %p82, %s83, %s84
    %p88 = pneg %p82
    %p89 = scmp.eq.s32.totalorder %s10, 1
    %p90 = por %p88, %p89
    %p91 = scmp.ne.s32.totalorder %s83, %s86
    %p92 = scmp.eq.s32.totalorder %s10, 0
    %p93 = por %p91, %p92
    %p94 = scmp.ne.s32.totalorder %s83, %s86
    %p95 = scmp.eq.s32.totalorder %s15, 1
    %p96 = por %p94, %p95
    %p97 = scmp.ne.s32.totalorder %s86, %s87
    %p98 = scmp.eq.s32.totalorder %s15, 0
    %p99 = por %p97, %p98
    %p100 = scmp.ne.s32.totalorder %s86, %s87
    %p101 = scmp.eq.s32.totalorder %s16, 1
    %p102 = por %p100, %p101
    %p104 = scmp.ne.s32.totalorder %s87, %s103
    %p105 = scmp.eq.s32.totalorder %s16, 0
    %p106 = por %p104, %p105
    %s107 = ssub.s32 %s17, %s29
    %s108 = ssub.s32 %s18, %s25
    %s109 = sor.u32 %s107, %s108
    %p110 = scmp.eq.s32.totalorder %s109, 0
    %s112 = sadd.s32 %s111, 1
    %s113 = scalar_select %p110, %s111, %s112
    %p116 = pneg %p110
    %p117 = scmp.eq.s32.totalorder %s10, 1
    %p118 = por %p116, %p117
    %p119 = scmp.ne.s32.totalorder %s111, %s114
    %p120 = scmp.eq.s32.totalorder %s10, 0
    %p121 = por %p119, %p120
    %p122 = scmp.ne.s32.totalorder %s111, %s114
    %p123 = scmp.eq.s32.totalorder %s15, 1
    %p124 = por %p122, %p123
    %p125 = scmp.ne.s32.totalorder %s114, %s115
    %p126 = scmp.eq.s32.totalorder %s15, 0
    %p127 = por %p125, %p126
    %p128 = scmp.ne.s32.totalorder %s114, %s115
    %p129 = scmp.eq.s32.totalorder %s16, 1
    %p130 = por %p128, %p129
    %p132 = scmp.ne.s32.totalorder %s115, %s131
    %p133 = scmp.eq.s32.totalorder %s16, 0
    %p134 = por %p132, %p133
    %p135 = scmp.le.s32.totalorder 1, %s10
    %p136 = scmp.lt.s32.totalorder %s10, 3
    %p137 = pnand %p135, %p136
    %p138 = pneg %p137
    // Predicated region
    $region9: #{down_forward.2} parent=5 // pred_check
      _
    $region10: #{down_forward.2} parent=5 // pred_check_branch
      %140 = sbr.rel (%p137) target = $region12
    $region11: #{down_forward.2} parent=5 // pred_region
      %s141 = ssub.s32 %s10, 1
      // Predicated region
      $region13: #{down_forward.2} parent=11 // pred_check
        %p142 = pneg %p71
      $region14: #{down_forward.2} parent=11 // pred_check_branch
        %144 = sbr.rel (%p142) target = $region16
      $region15: #{down_forward.2} parent=11 // pred_region
        _
      $region16: #{down_forward.2} parent=11 // pred_fallthru
        _
    $region12: #{down_forward.2} parent=5 // pred_fallthru
      _
    %p145 = scmp.lt.s32.totalorder %s10, 2
    // Predicated region
    $region17: #{down_forward.2} parent=5 // pred_check
      %p146 = pneg %p145
    $region18: #{down_forward.2} parent=5 // pred_check_branch
      %148 = sbr.rel (%p146) target = $region20
    $region19: #{down_forward.2} parent=5 // pred_region
      // Predicated region
      $region21: #{down_forward.2} parent=19 // pred_check
        %p149 = pneg %p44
      $region22: #{down_forward.2} parent=19 // pred_check_branch
        %151 = sbr.rel (%p149) target = $region24
      $region23: #{down_forward.2} parent=19 // pred_region
        %s152 = smul.u32 16, %s18
        %p153 = scmp.lt.s32.totalorder %s17, 1
        %s154 = scalar_select %p153, %s17, 1
        %p155 = scmp.lt.s32.totalorder %s152, 15
        %s156 = scalar_select %p155, %s152, 15
        %s157 = smul.addr %s154, 16
        %s158 = sadd.s32 %s156, %s157
        %s159 = smul.addr %s158, 4
        %s160 = scalar_lea.vmem %s0, %s159
        %s161 = smul.u32 16, %s18
      $region24: #{down_forward.2} parent=19 // pred_fallthru
        _
    $region20: #{down_forward.2} parent=5 // pred_fallthru
      _
    %p162 = scmp.le.s32.totalorder 1, %s10
    %p163 = scmp.lt.s32.totalorder %s10, 3
    %p164 = pnand %p162, %p163
    %p165 = pneg %p164
    // Predicated region
    $region25: #{down_forward.2} parent=5 // pred_check
      _
    $region26: #{down_forward.2} parent=5 // pred_check_branch
      %167 = sbr.rel (%p164) target = $region28
    $region27: #{down_forward.2} parent=5 // pred_region
      %s168 = ssub.s32 %s10, 1
      %s169 = smul.u32 16, %s20
      %p170 = scmp.lt.s32.totalorder %s19, 1
      %s171 = scalar_select %p170, %s19, 1
      %p172 = scmp.lt.s32.totalorder %s169, 15
      %s173 = scalar_select %p172, %s169, 15
      %s174 = smul.addr %s171, 16
      %s175 = sadd.s32 %s173, %s174
      %s176 = smul.addr %s175, 4
      %s177 = scalar_lea.vmem %s0, %s176
      %p178 = pneg %p50
      %p179 = pneg %p47
      %p180 = pneg %p71
      %p181 = pneg %p68
      %p182 = pneg %p99
      %p183 = pneg %p96
      %s184 = smul.u32 16, %s20
      %p185 = scmp.lt.s32.totalorder %s19, 1
      %s186 = scalar_select %p185, %s19, 1
      %p187 = scmp.lt.s32.totalorder %s184, 15
      %s188 = scalar_select %p187, %s184, 15
      %s189 = smul.addr %s186, 16
      %s190 = sadd.s32 %s188, %s189
      %s191 = smul.addr %s190, 4
      %s192 = scalar_lea.vmem %s2, %s191
      %p193 = pneg %p127
      %p194 = pneg %p124
      %p195 = scmp.lt.s32.totalorder %s19, 1
      %s196 = scalar_select %p195, %s19, 1
      %p197 = scmp.lt.s32.totalorder %s20, 0
      %s198 = scalar_select %p197, %s20, 0
      %s199 = sadd.s32 %s198, %s196
      %s200 = smul.addr %s199, 2
      %s201 = scalar_lea.vmem %s3, %s200
      %s202 = smul.u32 16, %s20
      %p203 = scmp.lt.s32.totalorder %s19, 1
      %s204 = scalar_select %p203, %s19, 1
      %p205 = scmp.lt.s32.totalorder %s202, 15
      %s206 = scalar_select %p205, %s202, 15
      %s207 = smul.addr %s204, 16
      %s208 = sadd.s32 %s206, %s207
      %s209 = smul.addr %s208, 4
      %s210 = scalar_lea.vmem %s0, %s209
      %s211 = smul.u32 16, %s20
      %s212 = smul.u32 16, %s20
      %p213 = scmp.lt.s32.totalorder %s19, 1
      %s214 = scalar_select %p213, %s19, 1
      %p215 = scmp.lt.s32.totalorder %s212, 15
      %s216 = scalar_select %p215, %s212, 15
      %s217 = smul.addr %s214, 16
      %s218 = sadd.s32 %s216, %s217
      %s219 = smul.addr %s218, 4
      %s220 = scalar_lea.vmem %s2, %s219
      %s221 = smul.u32 16, %s20
      %p222 = scmp.lt.s32.totalorder %s19, 1
      %s223 = scalar_select %p222, %s19, 1
      %p224 = scmp.lt.s32.totalorder %s20, 0
      %s225 = scalar_select %p224, %s20, 0
      %s226 = sadd.s32 %s225, %s223
      %s227 = smul.addr %s226, 2
      %s228 = scalar_lea.vmem %s3, %s227
      %v229 = vld [vmem:[%s210] sm:$0xf]
      %v230 = vld [vmem:[%s210 + $0x4] sm:$0xf]
      %v231 = vld [vmem:[%s210 + $0x8] sm:$0xf]
      %v232 = vld [vmem:[%s210 + $0xc] sm:$0xf]
      %v233 = vld [vmem:[%s210 + $0x10] sm:$0xf]
      %v234 = vld [vmem:[%s210 + $0x14] sm:$0xf]
      %v235 = vld [vmem:[%s210 + $0x18] sm:$0xf]
      %v236 = vld [vmem:[%s210 + $0x1c] sm:$0xf]
      %v237 = vld [vmem:[%s210 + $0x20] sm:$0xf]
      %v238 = vld [vmem:[%s210 + $0x24] sm:$0xf]
      %v239 = vld [vmem:[%s210 + $0x28] sm:$0xf]
      %v240 = vld [vmem:[%s210 + $0x2c] sm:$0xf]
      %v241 = vld [vmem:[%s210 + $0x30] sm:$0xf]
      %v242 = vld [vmem:[%s210 + $0x34] sm:$0xf]
      %v243 = vld [vmem:[%s210 + $0x38] sm:$0xf]
      %v244 = vld [vmem:[%s210 + $0x3c] sm:$0xf]
      %v245 = vld [vmem:[%s1] sm:$0xf]
      %v246 = vld [vmem:[%s1 + $0x4] sm:$0xf]
      %v247 = vld [vmem:[%s1 + $0x8] sm:$0xf]
      %v248 = vld [vmem:[%s1 + $0xc] sm:$0xf]
      %v249 = vld [vmem:[%s1 + $0x10] sm:$0xf]
      %v250 = vld [vmem:[%s1 + $0x14] sm:$0xf]
      %v251 = vld [vmem:[%s1 + $0x18] sm:$0xf]
      %v252 = vld [vmem:[%s1 + $0x1c] sm:$0xf]
      %v253 = vld [vmem:[%s1 + $0x20] sm:$0xf]
      %v254 = vld [vmem:[%s1 + $0x24] sm:$0xf]
      %v255 = vld [vmem:[%s1 + $0x28] sm:$0xf]
      %v256 = vld [vmem:[%s1 + $0x2c] sm:$0xf]
      %v257 = vld [vmem:[%s1 + $0x30] sm:$0xf]
      %v258 = vld [vmem:[%s1 + $0x34] sm:$0xf]
      %v259 = vld [vmem:[%s1 + $0x38] sm:$0xf]
      %v260 = vld [vmem:[%s1 + $0x3c] sm:$0xf]
      %v277 = vunpack.c.l.b16 %v229
      %v278 = vunpack.c.l.b16 %v230
      %v279 = vunpack.c.l.b16 %v231
      %v280 = vunpack.c.l.b16 %v232
      %v281 = vunpack.c.l.b16 %v233
      %v282 = vunpack.c.l.b16 %v234
      %v283 = vunpack.c.l.b16 %v235
      %v284 = vunpack.c.l.b16 %v236
      %v285 = vunpack.c.l.b16 %v237
      %v286 = vunpack.c.l.b16 %v238
      %v287 = vunpack.c.l.b16 %v239
      %v288 = vunpack.c.l.b16 %v240
      %v289 = vunpack.c.l.b16 %v241
      %v290 = vunpack.c.l.b16 %v242
      %v291 = vunpack.c.l.b16 %v243
      %v292 = vunpack.c.l.b16 %v244
      %v293 = vpack.c.b16 %v278, %v277
      %v294 = vpack.c.b16 %v280, %v279
      %v295 = vpack.c.b16 %v282, %v281
      %v296 = vpack.c.b16 %v284, %v283
      %v297 = vpack.c.b16 %v286, %v285
      %v298 = vpack.c.b16 %v288, %v287
      %v299 = vpack.c.b16 %v290, %v289
      %v300 = vpack.c.b16 %v292, %v291
      %v325 = vunpack.c.l.b16 %v245
      %v326 = vunpack.c.l.b16 %v246
      %v327 = vunpack.c.l.b16 %v247
      %v328 = vunpack.c.l.b16 %v248
      %v329 = vunpack.c.l.b16 %v249
      %v330 = vunpack.c.l.b16 %v250
      %v331 = vunpack.c.l.b16 %v251
      %v332 = vunpack.c.l.b16 %v252
      %v333 = vunpack.c.l.b16 %v253
      %v334 = vunpack.c.l.b16 %v254
      %v335 = vunpack.c.l.b16 %v255
      %v336 = vunpack.c.l.b16 %v256
      %v337 = vunpack.c.l.b16 %v257
      %v338 = vunpack.c.l.b16 %v258
      %v339 = vunpack.c.l.b16 %v259
      %v340 = vunpack.c.l.b16 %v260
      %v341 = vpack.c.b16 %v326, %v325
      %v342 = vpack.c.b16 %v328, %v327
      %v343 = vpack.c.b16 %v330, %v329
      %v344 = vpack.c.b16 %v332, %v331
      %v345 = vpack.c.b16 %v334, %v333
      %v346 = vpack.c.b16 %v336, %v335
      %v347 = vpack.c.b16 %v338, %v337
      %v348 = vpack.c.b16 %v340, %v339
      %357 = vmatpush.bf16.msra.mxu0 %v348
      %358 = vmatpush.bf16.msra.mxu0 %v347
      %359 = vmatpush.bf16.msra.mxu0 %v346
      %360 = vmatpush.bf16.msra.mxu0 %v345
      %361 = vmatpush.bf16.msra.mxu0 %v344
      %362 = vmatpush.bf16.msra.mxu0 %v343
      %363 = vmatpush.bf16.msra.mxu0 %v342
      %364 = vmatpush.bf16.msra.mxu0 %v341
      %365 = vmatmul.bf16.gmra.mxu0 %v293
      %v366 = vpop.f32.mrf.mxu0
      %v367 = vadd.f32 0.0, %v366
      %v368 = vpop.f32.mrf.mxu0
      %v369 = vadd.f32 0.0, %v368
      %370 = vmatmul.bf16.gmra.mxu0 %v294
      %v371 = vpop.f32.mrf.mxu0
      %v372 = vadd.f32 0.0, %v371
      %v373 = vpop.f32.mrf.mxu0
      %v374 = vadd.f32 0.0, %v373
      %375 = vmatmul.bf16.gmra.mxu0 %v295
      %v376 = vpop.f32.mrf.mxu0
      %v377 = vadd.f32 0.0, %v376
      %v378 = vpop.f32.mrf.mxu0
      %v379 = vadd.f32 0.0, %v378
      %380 = vmatmul.bf16.gmra.mxu0 %v296
      %v381 = vpop.f32.mrf.mxu0
      %v382 = vadd.f32 0.0, %v381
      %v383 = vpop.f32.mrf.mxu0
      %v384 = vadd.f32 0.0, %v383
      %385 = vmatmul.bf16.gmra.mxu0 %v297
      %v386 = vpop.f32.mrf.mxu0
      %v387 = vadd.f32 0.0, %v386
      %v388 = vpop.f32.mrf.mxu0
      %v389 = vadd.f32 0.0, %v388
      %390 = vmatmul.bf16.gmra.mxu0 %v298
      %v391 = vpop.f32.mrf.mxu0
      %v392 = vadd.f32 0.0, %v391
      %v393 = vpop.f32.mrf.mxu0
      %v394 = vadd.f32 0.0, %v393
      %395 = vmatmul.bf16.gmra.mxu0 %v299
      %v396 = vpop.f32.mrf.mxu0
      %v397 = vadd.f32 0.0, %v396
      %v398 = vpop.f32.mrf.mxu0
      %v399 = vadd.f32 0.0, %v398
      %400 = vmatmul.bf16.gmra.mxu0 %v300
      %v401 = vpop.f32.mrf.mxu0
      %v402 = vadd.f32 0.0, %v401
      %v403 = vpop.f32.mrf.mxu0
      %v404 = vadd.f32 0.0, %v403
      %405 = vdwg.mxu0
      %v406 = vadd.f32 %v367, %v369
      %v407 = vadd.f32 %v406, %v372
      %v408 = vadd.f32 %v407, %v374
      %v409 = vadd.f32 %v408, %v377
      %v410 = vadd.f32 %v409, %v379
      %v411 = vadd.f32 %v410, %v382
      %v412 = vadd.f32 %v411, %v384
      %v413 = vadd.f32 %v412, %v387
      %v414 = vadd.f32 %v413, %v389
      %v415 = vadd.f32 %v414, %v392
      %v416 = vadd.f32 %v415, %v394
      %v417 = vadd.f32 %v416, %v397
      %v418 = vadd.f32 %v417, %v399
      %v419 = vadd.f32 %v418, %v402
      %v420 = vadd.f32 %v419, %v404
      %v421 = vrot.slane %v420, 4
      %v422 = vadd.f32 %v420, %v421
      %v423 = vrot.slane %v422, 2
      %v424 = vadd.f32 %v422, %v423
      %v425 = vrot.slane %v424, 1
      %v426 = vadd.f32 %v424, %v425
      %427 = vst [vmem:[%s228] sm:$0x1] %v426
      %v428 = vmul.f32 %v367, %v367
      %v429 = vmul.f32 %v369, %v369
      %v430 = vmul.f32 %v372, %v372
      %v431 = vmul.f32 %v374, %v374
      %v432 = vmul.f32 %v377, %v377
      %v433 = vmul.f32 %v379, %v379
      %v434 = vmul.f32 %v382, %v382
      %v435 = vmul.f32 %v384, %v384
      %v436 = vmul.f32 %v387, %v387
      %v437 = vmul.f32 %v389, %v389
      %v438 = vmul.f32 %v392, %v392
      %v439 = vmul.f32 %v394, %v394
      %v440 = vmul.f32 %v397, %v397
      %v441 = vmul.f32 %v399, %v399
      %v442 = vmul.f32 %v402, %v402
      %v443 = vmul.f32 %v404, %v404
      %v444 = vadd.f32 %v428, %v429
      %v445 = vadd.f32 %v444, %v430
      %v446 = vadd.f32 %v445, %v431
      %v447 = vadd.f32 %v446, %v432
      %v448 = vadd.f32 %v447, %v433
      %v449 = vadd.f32 %v448, %v434
      %v450 = vadd.f32 %v449, %v435
      %v451 = vadd.f32 %v450, %v436
      %v452 = vadd.f32 %v451, %v437
      %v453 = vadd.f32 %v452, %v438
      %v454 = vadd.f32 %v453, %v439
      %v455 = vadd.f32 %v454, %v440
      %v456 = vadd.f32 %v455, %v441
      %v457 = vadd.f32 %v456, %v442
      %v458 = vadd.f32 %v457, %v443
      %v459 = vrot.slane %v458, 4
      %v460 = vadd.f32 %v458, %v459
      %v461 = vrot.slane %v460, 2
      %v462 = vadd.f32 %v460, %v461
      %v463 = vrot.slane %v462, 1
      %v464 = vadd.f32 %v462, %v463
      %465 = vst [vmem:[%s228 + $0x1] sm:$0x1] %v464
      %v466 = vpack.c.bf16 %v367, %v367
      %v467 = vpack.c.bf16 %v369, %v369
      %v468 = vpack.c.bf16 %v372, %v372
      %v469 = vpack.c.bf16 %v374, %v374
      %v470 = vpack.c.bf16 %v377, %v377
      %v471 = vpack.c.bf16 %v379, %v379
      %v472 = vpack.c.bf16 %v382, %v382
      %v473 = vpack.c.bf16 %v384, %v384
      %v474 = vpack.c.bf16 %v387, %v387
      %v475 = vpack.c.bf16 %v389, %v389
      %v476 = vpack.c.bf16 %v392, %v392
      %v477 = vpack.c.bf16 %v394, %v394
      %v478 = vpack.c.bf16 %v397, %v397
      %v479 = vpack.c.bf16 %v399, %v399
      %v480 = vpack.c.bf16 %v402, %v402
      %v481 = vpack.c.bf16 %v404, %v404
      %482 = vst [vmem:[%s220] sm:$0xf] %v466
      %483 = vst [vmem:[%s220 + $0x4] sm:$0xf] %v467
      %484 = vst [vmem:[%s220 + $0x8] sm:$0xf] %v468
      %485 = vst [vmem:[%s220 + $0xc] sm:$0xf] %v469
      %486 = vst [vmem:[%s220 + $0x10] sm:$0xf] %v470
      %487 = vst [vmem:[%s220 + $0x14] sm:$0xf] %v471
      %488 = vst [vmem:[%s220 + $0x18] sm:$0xf] %v472
      %489 = vst [vmem:[%s220 + $0x1c] sm:$0xf] %v473
      %490 = vst [vmem:[%s220 + $0x20] sm:$0xf] %v474
      %491 = vst [vmem:[%s220 + $0x24] sm:$0xf] %v475
      %492 = vst [vmem:[%s220 + $0x28] sm:$0xf] %v476
      %493 = vst [vmem:[%s220 + $0x2c] sm:$0xf] %v477
      %494 = vst [vmem:[%s220 + $0x30] sm:$0xf] %v478
      %495 = vst [vmem:[%s220 + $0x34] sm:$0xf] %v479
      %496 = vst [vmem:[%s220 + $0x38] sm:$0xf] %v480
      %497 = vst [vmem:[%s220 + $0x3c] sm:$0xf] %v481
      %s498 = smul.u32 16, %s20
      %p499 = scmp.lt.s32.totalorder %s19, 1
      %s500 = scalar_select %p499, %s19, 1
      %p501 = scmp.lt.s32.totalorder %s498, 15
      %s502 = scalar_select %p501, %s498, 15
      %s503 = smul.addr %s500, 16
      %s504 = sadd.s32 %s502, %s503
      %s505 = smul.addr %s504, 4
      %s506 = scalar_lea.vmem %s2, %s505
      %p507 = scmp.lt.s32.totalorder %s19, 1
      %s508 = scalar_select %p507, %s19, 1
      %p509 = scmp.lt.s32.totalorder %s20, 0
      %s510 = scalar_select %p509, %s20, 0
      %s511 = sadd.s32 %s510, %s508
      %s512 = smul.addr %s511, 2
      %s513 = scalar_lea.vmem %s3, %s512
      // Predicated region
      $region29: #{down_forward.2} parent=27 // pred_check
        %p514 = pneg %p96
      $region30: #{down_forward.2} parent=27 // pred_check_branch
        %516 = sbr.rel (%p514) target = $region32
      $region31: #{down_forward.2} parent=27 // pred_region
        %s517 = smul.u32 16, %s20
      $region32: #{down_forward.2} parent=27 // pred_fallthru
        _
      // Predicated region
      $region33: #{down_forward.2} parent=27 // pred_check
        %p518 = pneg %p124
      $region34: #{down_forward.2} parent=27 // pred_check_branch
        %520 = sbr.rel (%p518) target = $region36
      $region35: #{down_forward.2} parent=27 // pred_region
        _
      $region36: #{down_forward.2} parent=27 // pred_fallthru
        _
    $region28: #{down_forward.2} parent=5 // pred_fallthru
      _
    %p521 = scmp.le.s32.totalorder 2, %s10
    // Predicated region
    $region37: #{down_forward.2} parent=5 // pred_check
      %p522 = pneg %p521
    $region38: #{down_forward.2} parent=5 // pred_check_branch
      %524 = sbr.rel (%p522) target = $region40
    $region39: #{down_forward.2} parent=5 // pred_region
      %s525 = ssub.s32 %s10, 2
      // Predicated region
      $region41: #{down_forward.2} parent=39 // pred_check
        %p526 = pneg %p102
      $region42: #{down_forward.2} parent=39 // pred_check_branch
        %528 = sbr.rel (%p526) target = $region44
      $region43: #{down_forward.2} parent=39 // pred_region
        %s529 = smul.u32 16, %s22
        %p530 = scmp.lt.s32.totalorder %s21, 1
        %s531 = scalar_select %p530, %s21, 1
        %p532 = scmp.lt.s32.totalorder %s529, 15
        %s533 = scalar_select %p532, %s529, 15
        %s534 = smul.addr %s531, 16
        %s535 = sadd.s32 %s533, %s534
        %s536 = smul.addr %s535, 4
        %s537 = scalar_lea.vmem %s2, %s536
      $region44: #{down_forward.2} parent=39 // pred_fallthru
        _
      // Predicated region
      $region45: #{down_forward.2} parent=39 // pred_check
        %p538 = pneg %p130
      $region46: #{down_forward.2} parent=39 // pred_check_branch
        %540 = sbr.rel (%p538) target = $region48
      $region47: #{down_forward.2} parent=39 // pred_region
        %p541 = scmp.lt.s32.totalorder %s21, 1
        %s542 = scalar_select %p541, %s21, 1
        %p543 = scmp.lt.s32.totalorder %s22, 0
        %s544 = scalar_select %p543, %s22, 0
        %s545 = sadd.s32 %s544, %s542
        %s546 = smul.addr %s545, 2
        %s547 = scalar_lea.vmem %s3, %s546
      $region48: #{down_forward.2} parent=39 // pred_fallthru
        _
    $region40: #{down_forward.2} parent=5 // pred_fallthru
      _
  $region6: #{down_forward.2} parent=0 // loop_footer
    %s14 = sadd.s32 1, %s10
  $region7: #{down_forward.2} parent=0 // loop_footer_branch
    %9 = sbr.rel target = $region3
  $region8: #{down_forward.2} parent=0 // loop_exit
    _

</llo_original>
